<compile_context>
chip_gen: v7x
topology: tpu7x:2x2x1
jax: 0.10.0
libtpu: 0.0.40
codegen_flags: <defaults>
</compile_context>

<pallas_src>
import jax
import jax.numpy as jnp
from jax.experimental import pallas as pl
from jax.experimental.pallas import tpu as pltpu

_LANES = 128          # vreg lane width — output last dim (lane-dense stores)
_TILE_ROWS = 512      # 512 x 128 x 4 B = 256 KiB per output tile


def _fill_kernel(amp_ref, o_ref):
    # amp_ref: SMEM (1,) float32 holding exp(variance * 10)   (already exp'ed)
    # o_ref:   VMEM (tile_rows, 128) float32 output tile
    o_ref[...] = jnp.full(o_ref.shape, amp_ref[0], dtype=o_ref.dtype)


def _round_up(x, m):
    return ((x + m - 1) // m) * m


def single_variance_forward(x, variance):
    """Pallas equivalent of SingleVarianceNetwork.forward.

    Args:
      x: jnp array of shape [N, ...]; only N = x.shape[0] is used (never DMA'd).
      variance: jnp array of shape (1,), float32 (the learnable scalar).

    Returns:
      jnp array of shape [N, 1], float32, filled with exp(variance * 10).
    """
    n = x.shape[0]

    # Single scalar exp (one XLA scalar op); kernel stays EUP-free.
    amp = jnp.exp(variance.astype(jnp.float32) * 10.0).reshape(1)

    # Lane-dense slab: pad N up to rows x 128, rows padded to the tile size.
    rows = pl.cdiv(n, _LANES)
    rows_aligned = max(8, _round_up(rows, 8))           # sublane multiple of 8
    tile_rows = min(_TILE_ROWS, rows_aligned)
    rows_padded = _round_up(rows_aligned, tile_rows)
    grid = (rows_padded // tile_rows,)

    slab = pl.pallas_call(
        _fill_kernel,
        out_shape=jax.ShapeDtypeStruct((rows_padded, _LANES), jnp.float32),
        grid_spec=pltpu.PrefetchScalarGridSpec(
            num_scalar_prefetch=0,
            grid=grid,
            in_specs=[pl.BlockSpec(memory_space=pltpu.MemorySpace.SMEM)],
            out_specs=pl.BlockSpec((tile_rows, _LANES), lambda i: (i, 0)),
        ),
        compiler_params=pltpu.CompilerParams(
            dimension_semantics=("parallel",)),   # shards rows across v7x TCs
    )(amp)

    # Contiguous f32 reshape + slice: free metadata, drops the padding.
    return slab.reshape(-1)[:n].reshape(n, 1)


if __name__ == "__main__":
    # Deterministic parameter init (module __init__: a single scalar init_val).
    init_val = 0.3
    variance = jnp.array([init_val], dtype=jnp.float32)

    key = jax.random.PRNGKey(0)

    # Small example input consistent with the forward: a batch of 3-D points.
    x = jax.random.normal(key, (8, 3), dtype=jnp.float32)
    out = jax.block_until_ready(single_variance_forward(x, variance))
    ref = jnp.ones((x.shape[0], 1), jnp.float32) * jnp.exp(variance[0] * 10.0)
    assert out.shape == (8, 1), out.shape
    assert out.dtype == jnp.float32, out.dtype
    assert jnp.allclose(out, ref, rtol=1e-6, atol=1e-6), (out, ref)

    # A second, non-multiple-of-128 batch to exercise the pad/slice path.
    x2 = jax.random.normal(key, (300, 3), dtype=jnp.float32)
    out2 = jax.block_until_ready(single_variance_forward(x2, variance))
    ref2 = jnp.ones((300, 1), jnp.float32) * jnp.exp(variance[0] * 10.0)
    assert out2.shape == (300, 1), out2.shape
    assert jnp.allclose(out2, ref2, rtol=1e-6, atol=1e-6)

    print("KERNEL_OK")
</pallas_src>

<mosaic_0001>
module attributes {stable_mosaic.version = 11 : i64} {
  func.func @_fill_kernel(%arg0: i32, %arg1: memref<1xf32, #tpu.memory_space<smem>>, %arg2: memref<8x128xf32, #tpu.memory_space<vmem>>) attributes {dimension_semantics = [#tpu.dimension_semantics<parallel>], iteration_bounds = array<i64: 1>, scalar_prefetch = 0 : i64, scratch_operands = 0 : i64, tpu.core_type = #tpu.core_type<tc>, window_params = [{transform_indices = @transform_0, window_bounds = array<i64: 1>}, {transform_indices = @transform_1, window_bounds = array<i64: 8, 128>}]} {
    %c0 = arith.constant 0 : index
    %0 = memref.load %arg1[%c0] : memref<1xf32, #tpu.memory_space<smem>>
    %1 = vector.broadcast %0 : f32 to vector<8x128xf32>
    %c0_0 = arith.constant 0 : index
    %c0_1 = arith.constant 0 : index
    %2 = vector.load %arg2[%c0_0, %c0_1] : memref<8x128xf32, #tpu.memory_space<vmem>>, vector<8x128xf32>
    tpu.vector_store %arg2[%c0_0, %c0_1], %1 {strides = array<i32>} : memref<8x128xf32, #tpu.memory_space<vmem>>, vector<8x128xf32>,
    return
  }
  func.func @transform_0(%arg0: i32) -> i32 {
    %c0_i32 = arith.constant 0 : i32
    %c0_i32_0 = arith.constant 0 : i32
    return %c0_i32 : i32
  }
  func.func @transform_1(%arg0: i32) -> (i32, i32) {
    %c0_i32 = arith.constant 0 : i32
    %c0_i32_0 = arith.constant 0 : i32
    return %arg0, %c0_i32 : i32, i32
  }
}

</mosaic_0001>

<llo_original>
// kernel: tpu_custom_call.1
$region0: #{tpu_custom_call.1}
  #allocation0 [shape = 'u32[]', space=smem, size = 0x4, offset = 0x4, fixed_abs, tag = 'smem constant byte address 0x4 - core index']
  #allocation1 [shape = 'u32[144,128]{1,0:T(1,128)}', space=vmem, size = 0x12000, scoped, tag = 'internal scratch']
  #allocation2 [shape = 'f32[1]{0:T(128)S(6)}', space=smem, size = 0x200, scoped, tag = 'scoped memory for tpu_custom_call.1']
  %s0 = inlined_call_operand.<no memory space> [shape: f32[1], index: 0, kind: input, shape index: {}]
  %s1 = inlined_call_operand.hbm [shape: f32[8,128], index: 1, kind: output, shape index: {}]
  %s2 = sld [smem:[#allocation0]]
  $region14: #{tpu_custom_call.1} parent=0
    _
  %s4 = ssub.s32 1, %s2
  %s5 = scalar_select 0, %s4, %s2
  %6 = sst [smem:[#allocation2]] %s0
  $region1: #{tpu_custom_call.1} parent=0
    #allocation3 [shape = 'u8[4096]{0}', space=vmem, size = 0x1000, scoped, tag = 'output window, operand 0, single buffered']
    #allocation4 [shape = 's32[1]{0}', space=sflag, size = 0x4, scoped, tag = 'scoped memory for tpu_custom_call.1']
    %7 = vsyncpa [#allocation4], 0
    // Predicated region
    $region2: #{tpu_custom_call.1} parent=1 // pred_check
      _
    $region3: #{tpu_custom_call.1} parent=1 // pred_check_branch
      %9 = sbr.rel (0) target = $region5
    $region4: #{tpu_custom_call.1} parent=1 // pred_region
      _
    $region5: #{tpu_custom_call.1} parent=1 // pred_fallthru
      _
    %s10 = sld [smem:[#allocation2]]
    %v11 = vstv %s10
    %12 = vst [vmem:[#allocation3] sm:$0xff] %v11
    // Predicated region
    $region6: #{tpu_custom_call.1} parent=1 // pred_check
      _
    $region7: #{tpu_custom_call.1} parent=1 // pred_check_branch
      %14 = sbr.rel (0) target = $region9
    $region8: #{tpu_custom_call.1} parent=1 // pred_region
      %s16 = ssub.s32 128, 128
      %17 = vsyncadd [#allocation4], %s16
      %s19 = sshll.u32 [#allocation3], 4
      %s20 = int_to_ptr.vmem [resolvable:$true] %s19
      %22 = dma.vmem_to_hbm [thread:$0]  %s20, 128, %s1, [#allocation4]
    $region9: #{tpu_custom_call.1} parent=1 // pred_fallthru
      _
    // Predicated region
    $region10: #{tpu_custom_call.1} parent=1 // pred_check
      _
    $region11: #{tpu_custom_call.1} parent=1 // pred_check_branch
      %24 = sbr.rel (0) target = $region13
    $region12: #{tpu_custom_call.1} parent=1 // pred_region
      %25 = dma.done [#allocation4], 128
    $region13: #{tpu_custom_call.1} parent=1 // pred_fallthru
      _
    %26 = vsyncpa [#allocation4], 1

</llo_original>
